<compile_context>
chip_gen: v6e
topology: v6e:2x2x1
jax: 0.10.0
libtpu: 0.0.40
codegen_flags: <defaults>
</compile_context>

<pallas_src>
import functools

import jax
import jax.numpy as jnp
from jax.experimental import pallas as pl
from jax.experimental.pallas import tpu as pltpu

_LANE = 128
_SUB = 8
_TILE_M_DEFAULT = 32 * 1024   # lanes along M = N/8  (=> 256K original elements / tile)


def _cdiv(a, b):
    return (a + b - 1) // b


def _round_up(a, b):
    return _cdiv(a, b) * b


def _wql_kernel(yt_ref, w_ref, yp_ref, out_ref, acc_ref, *, taus2m1, n_quantiles):
    """Per-tile partial sum of 2 * weighted-quantile loss.

    yt_ref : (8, TM)    source dtype : y_true
    w_ref  : (8, TM)    source dtype : weights
    yp_ref : (K, 8, TM) source dtype : y_pred transposed
    out_ref: (8, 128) f32            : total (broadcast), written on last tile
    acc_ref: (8, TM) f32 VMEM scratch: running elementwise partial sums
    """
    j = pl.program_id(0)

    @pl.when(j == 0)
    def _init():
        acc_ref[...] = jnp.zeros_like(acc_ref)

    yt = yt_ref[...].astype(jnp.float32)       # (8, TM)
    w = w_ref[...].astype(jnp.float32)         # (8, TM)

    # sum_k ((2*tau_k - 1) * d_k + |d_k|), unrolled over K (K is tiny).
    partial = None
    for k in range(n_quantiles):
        d = yt - yp_ref[k].astype(jnp.float32)             # (8, TM)
        lk = jnp.float32(taus2m1[k]) * d + jnp.abs(d)
        partial = lk if partial is None else partial + lk

    # Weight multiply once per position (factored out of the K sum).
    acc_ref[...] += w * partial

    @pl.when(j == pl.num_programs(0) - 1)
    def _finish():
        s = jnp.sum(acc_ref[...], keepdims=True)           # single XLU reduce
        out_ref[...] = jnp.broadcast_to(s, (8, 128))


def weighted_loss2(y_true, y_pred, weights, tau_seq, eps=0.001, *,
                   tile_m=_TILE_M_DEFAULT):
    """Pallas implementation of WeightedLoss2.forward (eps unused, as in torch)."""
    del eps  # unused in the PyTorch forward as well
    B, D, K = y_pred.shape
    N = B * D
    taus = tuple(float(t) for t in tau_seq)
    assert len(taus) == K
    assert tile_m % _LANE == 0

    # Flat views (free) + the single real repack pass: y_pred (N,K) -> (K,N).
    yt = y_true.reshape(N)
    w = weights.reshape(N)
    yp = y_pred.reshape(N, K).T                              # (K, N)

    # Lane tiling along M = ceil(N/8); pad only up to one tile.
    m_needed = _round_up(_cdiv(N, _SUB), _LANE)
    tm = min(tile_m, m_needed)
    m_pad = _round_up(m_needed, tm)
    n_pad = _SUB * m_pad
    if n_pad != N:
        pad = n_pad - N
        yt = jnp.pad(yt, (0, pad))
        w = jnp.pad(w, (0, pad))
        yp = jnp.pad(yp, ((0, 0), (0, pad)))

    yt2 = yt.reshape(_SUB, m_pad)                            # free reshapes
    w2 = w.reshape(_SUB, m_pad)
    yp3 = yp.reshape(K, _SUB, m_pad)

    n_tiles = m_pad // tm
    kernel = functools.partial(
        _wql_kernel,
        taus2m1=tuple(2.0 * t - 1.0 for t in taus),
        n_quantiles=K)

    partials = pl.pallas_call(
        kernel,
        out_shape=jax.ShapeDtypeStruct((8, 128), jnp.float32),
        grid=(n_tiles,),
        in_specs=[
            pl.BlockSpec((_SUB, tm), lambda j: (0, j)),
            pl.BlockSpec((_SUB, tm), lambda j: (0, j)),
            pl.BlockSpec((K, _SUB, tm), lambda j: (0, 0, j)),
        ],
        out_specs=pl.BlockSpec((8, 128), lambda j: (0, 0)),
        scratch_shapes=[pltpu.VMEM((_SUB, tm), jnp.float32)],
        compiler_params=pltpu.CompilerParams(
            dimension_semantics=("arbitrary",)),
    )(yt2, w2, yp3)

    # Fold the factored-out 0.5 into the mean scale.
    return partials[0, 0] * jnp.float32(0.5 / (N * K))


def _reference(y_true, y_pred, weights, tau_seq):
    """Pure-JAX reference mirroring the PyTorch forward."""
    tau = jnp.asarray(tau_seq, dtype=jnp.float32)
    diff = y_true[..., None] - y_pred
    loss = weights[..., None] * diff * (tau - (jnp.sign(-diff) + 1.0) / 2.0)
    return jnp.mean(loss)


if __name__ == "__main__":
    # Deterministic module parameter: quantile sequence.
    tau_seq = [0.1, 0.5, 0.9]

    # Small shapes implied by the forward: batch=2, diseases=8, quantiles=3.
    B, D, K = 2, 8, len(tau_seq)
    key = jax.random.PRNGKey(0)
    k1, k2, k3 = jax.random.split(key, 3)
    y_true = jax.random.normal(k1, (B, D), dtype=jnp.float32)
    y_pred = jax.random.normal(k2, (B, D, K), dtype=jnp.float32)
    weights = jax.random.uniform(k3, (B, D), dtype=jnp.float32)

    out = jax.block_until_ready(weighted_loss2(y_true, y_pred, weights, tau_seq))
    ref = _reference(y_true, y_pred, weights, tau_seq)
    assert jnp.allclose(out, ref, atol=1e-5, rtol=1e-5), (out, ref)

    # Second check: larger N with a tiny tile so the multi-tile accumulation
    # and padded-tail paths carry real data.
    B2, D2 = 4, 600
    k4, k5, k6 = jax.random.split(jax.random.PRNGKey(1), 3)
    y_true2 = jax.random.normal(k4, (B2, D2), dtype=jnp.float32)
    y_pred2 = jax.random.normal(k5, (B2, D2, K), dtype=jnp.float32)
    weights2 = jax.random.uniform(k6, (B2, D2), dtype=jnp.float32)
    out2 = jax.block_until_ready(
        weighted_loss2(y_true2, y_pred2, weights2, tau_seq, tile_m=128))
    ref2 = _reference(y_true2, y_pred2, weights2, tau_seq)
    assert jnp.allclose(out2, ref2, atol=1e-5, rtol=1e-5), (out2, ref2)

    print("KERNEL_OK")
</pallas_src>

<mosaic_0001>
module attributes {stable_mosaic.version = 11 : i64} {
  func.func @_wql_kernel(%arg0: i32, %arg1: memref<8x128xf32, #tpu.memory_space<vmem>>, %arg2: memref<8x128xf32, #tpu.memory_space<vmem>>, %arg3: memref<3x8x128xf32, #tpu.memory_space<vmem>>, %arg4: memref<8x128xf32, #tpu.memory_space<vmem>>, %arg5: memref<8x128xf32, #tpu.memory_space<vmem>>) attributes {dimension_semantics = [#tpu.dimension_semantics<arbitrary>], iteration_bounds = array<i64: 1>, scalar_prefetch = 0 : i64, scratch_operands = 1 : i64, tpu.core_type = #tpu.core_type<tc>, window_params = [{transform_indices = @transform_0, window_bounds = array<i64: 8, 128>}, {transform_indices = @transform_1, window_bounds = array<i64: 8, 128>}, {transform_indices = @transform_2, window_bounds = array<i64: 3, 8, 128>}, {pipeline_mode = #tpu.pipeline_mode<synchronous>, transform_indices = @transform_3, window_bounds = array<i64: 8, 128>}]} {
    %c0_i32 = arith.constant 0 : i32
    %0 = arith.cmpi eq, %arg0, %c0_i32 : i32
    %1 = arith.extui %0 : i1 to i32
    %c0_i32_0 = arith.constant 0 : i32
    %2 = arith.cmpi ne, %1, %c0_i32_0 : i32
    scf.if %2 {
      %cst_19 = arith.constant 0.000000e+00 : f32
      %35 = vector.broadcast %cst_19 : f32 to vector<8x128xf32>
      %c0_20 = arith.constant 0 : index
      %c0_21 = arith.constant 0 : index
      %36 = vector.load %arg5[%c0_20, %c0_21] : memref<8x128xf32, #tpu.memory_space<vmem>>, vector<8x128xf32>
      tpu.vector_store %arg5[%c0_20, %c0_21], %35 {strides = array<i32>} : memref<8x128xf32, #tpu.memory_space<vmem>>, vector<8x128xf32>,
    } else {
    }
    %c0 = arith.constant 0 : index
    %c0_1 = arith.constant 0 : index
    %3 = vector.load %arg1[%c0, %c0_1] : memref<8x128xf32, #tpu.memory_space<vmem>>, vector<8x128xf32>
    %c0_2 = arith.constant 0 : index
    %c0_3 = arith.constant 0 : index
    %4 = vector.load %arg2[%c0_2, %c0_3] : memref<8x128xf32, #tpu.memory_space<vmem>>, vector<8x128xf32>
    %c0_4 = arith.constant 0 : index
    %c0_5 = arith.constant 0 : index
    %c0_6 = arith.constant 0 : index
    %5 = vector.load %arg3[%c0_4, %c0_5, %c0_6] : memref<3x8x128xf32, #tpu.memory_space<vmem>>, vector<1x8x128xf32>
    %6 = vector.shape_cast %5 : vector<1x8x128xf32> to vector<8x128xf32>
    %7 = arith.subf %3, %6 : vector<8x128xf32>
    %cst = arith.constant -8.000000e-01 : f32
    %8 = vector.broadcast %cst : f32 to vector<8x128xf32>
    %9 = arith.mulf %8, %7 : vector<8x128xf32>
    %10 = math.absf %7 : vector<8x128xf32>
    %11 = arith.addf %9, %10 : vector<8x128xf32>
    %c1 = arith.constant 1 : index
    %c0_7 = arith.constant 0 : index
    %c0_8 = arith.constant 0 : index
    %12 = vector.load %arg3[%c1, %c0_7, %c0_8] : memref<3x8x128xf32, #tpu.memory_space<vmem>>, vector<1x8x128xf32>
    %13 = vector.shape_cast %12 : vector<1x8x128xf32> to vector<8x128xf32>
    %14 = arith.subf %3, %13 : vector<8x128xf32>
    %cst_9 = arith.constant 0.000000e+00 : f32
    %15 = vector.broadcast %cst_9 : f32 to vector<8x128xf32>
    %16 = arith.mulf %15, %14 : vector<8x128xf32>
    %17 = math.absf %14 : vector<8x128xf32>
    %18 = arith.addf %16, %17 : vector<8x128xf32>
    %19 = arith.addf %11, %18 : vector<8x128xf32>
    %c2 = arith.constant 2 : index
    %c0_10 = arith.constant 0 : index
    %c0_11 = arith.constant 0 : index
    %20 = vector.load %arg3[%c2, %c0_10, %c0_11] : memref<3x8x128xf32, #tpu.memory_space<vmem>>, vector<1x8x128xf32>
    %21 = vector.shape_cast %20 : vector<1x8x128xf32> to vector<8x128xf32>
    %22 = arith.subf %3, %21 : vector<8x128xf32>
    %cst_12 = arith.constant 8.000000e-01 : f32
    %23 = vector.broadcast %cst_12 : f32 to vector<8x128xf32>
    %24 = arith.mulf %23, %22 : vector<8x128xf32>
    %25 = math.absf %22 : vector<8x128xf32>
    %26 = arith.addf %24, %25 : vector<8x128xf32>
    %27 = arith.addf %19, %26 : vector<8x128xf32>
    %c0_13 = arith.constant 0 : index
    %c0_14 = arith.constant 0 : index
    %28 = vector.load %arg5[%c0_13, %c0_14] : memref<8x128xf32, #tpu.memory_space<vmem>>, vector<8x128xf32>
    %29 = arith.mulf %4, %27 : vector<8x128xf32>
    %30 = arith.addf %28, %29 : vector<8x128xf32>
    %c0_15 = arith.constant 0 : index
    %c0_16 = arith.constant 0 : index
    %31 = vector.load %arg5[%c0_15, %c0_16] : memref<8x128xf32, #tpu.memory_space<vmem>>, vector<8x128xf32>
    tpu.vector_store %arg5[%c0_15, %c0_16], %30 {strides = array<i32>} : memref<8x128xf32, #tpu.memory_space<vmem>>, vector<8x128xf32>,
    %c0_i32_17 = arith.constant 0 : i32
    %32 = arith.cmpi eq, %arg0, %c0_i32_17 : i32
    %33 = arith.extui %32 : i1 to i32
    %c0_i32_18 = arith.constant 0 : i32
    %34 = arith.cmpi ne, %33, %c0_i32_18 : i32
    scf.if %34 {
      %c0_19 = arith.constant 0 : index
      %c0_20 = arith.constant 0 : index
      %35 = vector.load %arg5[%c0_19, %c0_20] : memref<8x128xf32, #tpu.memory_space<vmem>>, vector<8x128xf32>
      %36 = vector.shape_cast %35 : vector<8x128xf32> to vector<1x8x128xf32>
      %cst_21 = arith.constant dense<0.000000e+00> : vector<1xf32>
      %37 = vector.multi_reduction <add>, %36, %cst_21 [1, 2] : vector<1x8x128xf32> to vector<1xf32>
      %38 = vector.shape_cast %37 : vector<1xf32> to vector<1x1x1xf32>
      %39 = vector.extract %38[0, 0, 0] : f32 from vector<1x1x1xf32>
      %40 = vector.broadcast %39 : f32 to vector<1x1xf32>
      %41 = vector.shape_cast %40 : vector<1x1xf32> to vector<1x1xf32>
      %42 = vector.broadcast %41 : vector<1x1xf32> to vector<8x128xf32>
      %c0_22 = arith.constant 0 : index
      %c0_23 = arith.constant 0 : index
      %43 = vector.load %arg4[%c0_22, %c0_23] : memref<8x128xf32, #tpu.memory_space<vmem>>, vector<8x128xf32>
      tpu.vector_store %arg4[%c0_22, %c0_23], %42 {strides = array<i32>} : memref<8x128xf32, #tpu.memory_space<vmem>>, vector<8x128xf32>,
    } else {
    }
    return
  }
  func.func @transform_0(%arg0: i32) -> (i32, i32) {
    %c0_i32 = arith.constant 0 : i32
    %c0_i32_0 = arith.constant 0 : i32
    return %c0_i32, %arg0 : i32, i32
  }
  func.func @transform_1(%arg0: i32) -> (i32, i32) {
    %c0_i32 = arith.constant 0 : i32
    %c0_i32_0 = arith.constant 0 : i32
    return %c0_i32, %arg0 : i32, i32
  }
  func.func @transform_2(%arg0: i32) -> (i32, i32, i32) {
    %c0_i32 = arith.constant 0 : i32
    %c0_i32_0 = arith.constant 0 : i32
    %c0_i32_1 = arith.constant 0 : i32
    return %c0_i32, %c0_i32_0, %arg0 : i32, i32, i32
  }
  func.func @transform_3(%arg0: i32) -> (i32, i32) {
    %c0_i32 = arith.constant 0 : i32
    %c0_i32_0 = arith.constant 0 : i32
    %c0_i32_1 = arith.constant 0 : i32
    return %c0_i32, %c0_i32_0 : i32, i32
  }
}

</mosaic_0001>

<llo_original>
// kernel: tpu_custom_call.1
$region0: #{tpu_custom_call.1}
  #allocation0 [shape = 'u32[]', space=smem, size = 0x4, offset = 0x4, fixed_abs, tag = 'smem constant byte address 0x4 - core index']
  #allocation1 [shape = 'u32[144,128]{1,0:T(1,128)}', space=vmem, size = 0x12000, scoped, tag = 'internal scratch']
  #allocation2 [shape = 'f32[8,128]{1,0:T(8,128)}', space=vmem, size = 0x1000, scoped, tag = 'scratch operand']
  %s0 = inlined_call_operand.hbm [shape: f32[8,128], index: 0, kind: input, shape index: {}]
  %s1 = inlined_call_operand.hbm [shape: f32[8,128], index: 1, kind: input, shape index: {}]
  %s2 = inlined_call_operand.hbm [shape: f32[3,8,128], index: 2, kind: input, shape index: {}]
  %s3 = inlined_call_operand.hbm [shape: f32[8,128], index: 3, kind: output, shape index: {}]
  %s4 = sld [smem:[#allocation0]]
  $region42: #{tpu_custom_call.1} parent=0
    _
  %s6 = ssub.s32 1, %s4
  %s7 = scalar_select 0, %s6, %s4
  $region1: #{tpu_custom_call.1} parent=0
    #allocation3 [shape = 'u8[4096]{0}', space=vmem, size = 0x1000, scoped, tag = 'input window, operand 0, single buffered']
    #allocation4 [shape = 's32[1]{0}', space=sflag, size = 0x4, scoped, tag = 'scoped memory for tpu_custom_call.1']
    #allocation5 [shape = 's32[1]{0}', space=sflag, size = 0x4, scoped, tag = 'scoped memory for tpu_custom_call.1']
    #allocation6 [shape = 'u8[4096]{0}', space=vmem, size = 0x1000, scoped, tag = 'input window, operand 1, single buffered']
    #allocation7 [shape = 's32[1]{0}', space=sflag, size = 0x4, scoped, tag = 'scoped memory for tpu_custom_call.1']
    #allocation8 [shape = 'u8[12288]{0}', space=vmem, size = 0x3000, scoped, tag = 'input window, operand 2, single buffered']
    #allocation9 [shape = 'u8[4096]{0}', space=vmem, size = 0x1000, scoped, tag = 'output window, operand 0, single buffered']
    %8 = vsyncpa [#allocation4], 0
    %9 = vsyncpa [#allocation7], 0
    %10 = vsyncpa [#allocation5], 0
    // Predicated region
    $region2: #{tpu_custom_call.1} parent=1 // pred_check
      _
    $region3: #{tpu_custom_call.1} parent=1 // pred_check_branch
      %12 = sbr.rel (0) target = $region5
    $region4: #{tpu_custom_call.1} parent=1 // pred_region
      %s14 = ssub.s32 128, 128
      %15 = vsyncadd [#allocation4], %s14
      %s17 = sshll.u32 [#allocation3], 4
      %s18 = int_to_ptr.vmem [resolvable:$true] %s17
      %20 = dma.hbm_to_vmem [thread:$0]  %s0, 128, %s18, [#allocation4]
    $region5: #{tpu_custom_call.1} parent=1 // pred_fallthru
      _
    // Predicated region
    $region6: #{tpu_custom_call.1} parent=1 // pred_check
      _
    $region7: #{tpu_custom_call.1} parent=1 // pred_check_branch
      %22 = sbr.rel (0) target = $region9
    $region8: #{tpu_custom_call.1} parent=1 // pred_region
      %s24 = ssub.s32 128, 128
      %25 = vsyncadd [#allocation7], %s24
      %s27 = sshll.u32 [#allocation6], 4
      %s28 = int_to_ptr.vmem [resolvable:$true] %s27
      %30 = dma.hbm_to_vmem [thread:$0]  %s1, 128, %s28, [#allocation7]
    $region9: #{tpu_custom_call.1} parent=1 // pred_fallthru
      _
    // Predicated region
    $region10: #{tpu_custom_call.1} parent=1 // pred_check
      _
    $region11: #{tpu_custom_call.1} parent=1 // pred_check_branch
      %32 = sbr.rel (0) target = $region13
    $region12: #{tpu_custom_call.1} parent=1 // pred_region
      %s34 = ssub.s32 384, 384
      %35 = vsyncadd [#allocation7], %s34
      %s36 = sshll.u32 [#allocation8], 4
      %s37 = int_to_ptr.vmem [resolvable:$true] %s36
      %42 = dma.hbm_to_vmem [thread:$0]  %s2, 384, %s37, [#allocation7], 128, 128, 8
    $region13: #{tpu_custom_call.1} parent=1 // pred_fallthru
      _
    // Predicated region
    $region14: #{tpu_custom_call.1} parent=1 // pred_check
      _
    $region15: #{tpu_custom_call.1} parent=1 // pred_check_branch
      %44 = sbr.rel (0) target = $region17
    $region16: #{tpu_custom_call.1} parent=1 // pred_region
      %45 = dma.done [#allocation4], 128
    $region17: #{tpu_custom_call.1} parent=1 // pred_fallthru
      _
    // Predicated region
    $region18: #{tpu_custom_call.1} parent=1 // pred_check
      _
    $region19: #{tpu_custom_call.1} parent=1 // pred_check_branch
      %47 = sbr.rel (0) target = $region21
    $region20: #{tpu_custom_call.1} parent=1 // pred_region
      %48 = dma.done [#allocation7], 128
    $region21: #{tpu_custom_call.1} parent=1 // pred_fallthru
      _
    // Predicated region
    $region22: #{tpu_custom_call.1} parent=1 // pred_check
      _
    $region23: #{tpu_custom_call.1} parent=1 // pred_check_branch
      %50 = sbr.rel (0) target = $region25
    $region24: #{tpu_custom_call.1} parent=1 // pred_region
      %51 = dma.done [#allocation7], 384
    $region25: #{tpu_custom_call.1} parent=1 // pred_fallthru
      _
    %p52 = scmp.eq.s32.totalorder 0, 0
    // Predicated region
    $region26: #{tpu_custom_call.1} parent=1 // pred_check
      %p53 = pneg %p52
    $region27: #{tpu_custom_call.1} parent=1 // pred_check_branch
      %55 = sbr.rel (%p53) target = $region29
    $region28: #{tpu_custom_call.1} parent=1 // pred_region
      %56 = vst [vmem:[#allocation2] sm:$0xff] 0.0
    $region29: #{tpu_custom_call.1} parent=1 // pred_fallthru
      _
    %v57 = vld [vmem:[#allocation3] sm:$0xff]
    %v58 = vld [vmem:[#allocation6] sm:$0xff]
    %v59 = vld [vmem:[#allocation8] sm:$0xff]
    %v60 = vsub.f32 %v57, %v59
    %v61 = vmul.f32 %v60, -0.8
    %v62 = vand.u32 2147483647, %v60
    %v63 = vadd.f32 %v61, %v62
    %s64 = scalar_lea.vmem [#allocation8], 8
    %v65 = vld [vmem:[%s64] sm:$0xff]
    %v66 = vsub.f32 %v57, %v65
    %v67 = vmul.f32 %v66, 0.0
    %v68 = vand.u32 2147483647, %v66
    %v69 = vadd.f32 %v67, %v68
    %v70 = vadd.f32 %v63, %v69
    %s71 = scalar_lea.vmem [#allocation8], 16
    %v72 = vld [vmem:[%s71] sm:$0xff]
    %v73 = vsub.f32 %v57, %v72
    %v74 = vmul.f32 %v73, 0.8
    %v75 = vand.u32 2147483647, %v73
    %v76 = vadd.f32 %v74, %v75
    %v77 = vadd.f32 %v70, %v76
    %v78 = vld [vmem:[#allocation2] sm:$0xff]
    %v79 = vmul.f32 %v58, %v77
    %v80 = vadd.f32 %v78, %v79
    %81 = vst [vmem:[#allocation2] sm:$0xff] %v80
    // Predicated region
    $region30: #{tpu_custom_call.1} parent=1 // pred_check
      %p82 = pneg %p52
    $region31: #{tpu_custom_call.1} parent=1 // pred_check_branch
      %84 = sbr.rel (%p82) target = $region33
    $region32: #{tpu_custom_call.1} parent=1 // pred_region
      %v85 = vld [vmem:[#allocation2] sm:$0xff]
      %86 = vadd.xlane.f32.xlu0 %v85
      %v87 = vpop.xlane.xlu0 %86
      %v88 = vrot.slane %v87, 4
      %v89 = vadd.f32 %v87, %v88
      %v90 = vrot.slane %v89, 2
      %v91 = vadd.f32 %v89, %v90
      %v92 = vrot.slane %v91, 1
      %v93 = vadd.f32 %v91, %v92
      %s94 = vtos %v93
      %v95 = vstv %s94
      %96 = vst [vmem:[#allocation9] sm:$0xff] %v95
    $region33: #{tpu_custom_call.1} parent=1 // pred_fallthru
      _
    // Predicated region
    $region34: #{tpu_custom_call.1} parent=1 // pred_check
      _
    $region35: #{tpu_custom_call.1} parent=1 // pred_check_branch
      %98 = sbr.rel (0) target = $region37
    $region36: #{tpu_custom_call.1} parent=1 // pred_region
      %s100 = ssub.s32 128, 128
      %101 = vsyncadd [#allocation5], %s100
      %s103 = sshll.u32 [#allocation9], 4
      %s104 = int_to_ptr.vmem [resolvable:$true] %s103
      %106 = dma.vmem_to_hbm [thread:$0]  %s104, 128, %s3, [#allocation5]
    $region37: #{tpu_custom_call.1} parent=1 // pred_fallthru
      _
    // Predicated region
    $region38: #{tpu_custom_call.1} parent=1 // pred_check
      _
    $region39: #{tpu_custom_call.1} parent=1 // pred_check_branch
      %108 = sbr.rel (0) target = $region41
    $region40: #{tpu_custom_call.1} parent=1 // pred_region
      %109 = dma.done [#allocation5], 128
    $region41: #{tpu_custom_call.1} parent=1 // pred_fallthru
      _
    %110 = vsyncpa [#allocation4], 1
    %111 = vsyncpa [#allocation7], 1
    %112 = vsyncpa [#allocation5], 1

</llo_original>
